<compile_context>
chip_gen: v5e
topology: v5e:2x2
jax: 0.10.0
libtpu: 0.0.40
codegen_flags: <defaults>
</compile_context>

<pallas_src>
import functools

import jax
import jax.numpy as jnp
from jax.experimental import pallas as pl
from jax.experimental.pallas import tpu as pltpu


def _round_up(n, m):
    return ((n + m - 1) // m) * m


def adapter_kernel(x_ref, w1_ref, b1_ref, w2_ref, b2_ref, o_ref, *,
                   skip_connect, approximate_gelu):
    """One row-tile: fc1 -> GELU -> fc2 (+ skip).  f32 accumulation throughout."""
    x = x_ref[...]                                            # (tile_r, D), input dtype
    # Matmul operands are cast to the weight dtype (bf16 in the default path);
    # the residual below uses the un-cast x, so skip fidelity is preserved.
    h = jnp.dot(x.astype(w1_ref.dtype), w1_ref[...],
                preferred_element_type=jnp.float32)
    h = h + b1_ref[...].astype(jnp.float32)
    h = jax.nn.gelu(h, approximate=approximate_gelu)
    y = jnp.dot(h.astype(w2_ref.dtype), w2_ref[...],
                preferred_element_type=jnp.float32)
    y = y + b2_ref[...].astype(jnp.float32)
    if skip_connect:
        y = y + x.astype(jnp.float32)
    o_ref[...] = y.astype(o_ref.dtype)


def prepare_adapter_params(w1, b1, w2, b2, compute_dtype=jnp.bfloat16):
    """Hoistable prep: cast weights to the compute dtype, biases to f32 rows."""
    cdt = jnp.dtype(compute_dtype)
    return (w1.astype(cdt), b1.astype(jnp.float32).reshape(1, -1),
            w2.astype(cdt), b2.astype(jnp.float32).reshape(1, -1))


def adapter_forward(x, w1, b1, w2, b2, *, skip_connect=True, tile_rows=1024,
                    compute_dtype=jnp.bfloat16, approximate_gelu=None):
    """x: (..., D_features). w1: (D, H), w2: (H, D) (stored as (in, out)).

    compute_dtype: dtype of the MXU operands (weights + matmul LHS). Default
    bf16 (recommended on all TPU generations); None keeps x.dtype for exact
    parity with the PyTorch module. Output keeps x's shape and dtype.
    """
    orig_shape = x.shape
    D = orig_shape[-1]
    H = w1.shape[-1]

    x2 = x.reshape(-1, D)
    R = x2.shape[0]

    cdt = jnp.dtype(compute_dtype) if compute_dtype is not None else jnp.dtype(x.dtype)
    if approximate_gelu is None:
        # tanh GELU routes to the otherwise-idle EUP slot; keep exact erf GELU
        # (nn.GELU() default) for the full-precision parity path.
        approximate_gelu = (cdt == jnp.dtype(jnp.bfloat16))

    # No-ops if the caller already hoisted this via prepare_adapter_params.
    w1c, b1r, w2c, b2r = prepare_adapter_params(w1, b1, w2, b2, cdt)

    x_is = jnp.dtype(x.dtype).itemsize
    w_is = cdt.itemsize

    # ---- Generation-aware VMEM budget -------------------------------------
    try:
        vmem_cap = int(pltpu.get_tpu_info().vmem_capacity_bytes)
    except Exception:
        vmem_cap = 64 * 1024 * 1024            # conservative: v7x per-TC size
    budget = int(vmem_cap * 0.45)              # working-set target for tile shrink
    limit_cap = min(int(vmem_cap * 0.8), 100 * 1024 * 1024)

    # Footprint model with the *actual* stored dtypes.  Weights are counted as
    # double-buffered so the estimate stays valid even if the Buffered(1)
    # request is ignored by the runtime.
    weight_bytes = 2 * 2 * D * H * w_is
    bias_bytes = 2 * 8 * (_round_up(H, 128) + _round_up(D, 128)) * 4

    def _vmem_estimate(tr):
        return (2 * tr * D * x_is              # x tile, double-buffered
                + 2 * tr * D * x_is            # out tile, double-buffered
                + weight_bytes + bias_bytes
                + tr * (2 * D + 2 * H) * 4)    # in-kernel f32/bf16 temporaries

    # ---- Row-tile selection -------------------------------------------------
    tile_r = min(max(8, _round_up(int(tile_rows), 8)), _round_up(R, 8))
    if R > 8:
        # >= 2 grid steps so the "parallel" row axis can split across the two
        # TensorCores on v7x (harmless single extra step elsewhere).
        tile_r = min(tile_r, _round_up(pl.cdiv(R, 2), 8))
    while tile_r > 64 and _vmem_estimate(tile_r) > budget:
        tile_r = max(64, _round_up(tile_r // 2, 8))
    tile_r = max(8, tile_r)
    grid_steps = pl.cdiv(R, tile_r)

    vmem_limit = int(min(limit_cap, max(32 * 1024 * 1024, 2 * _vmem_estimate(tile_r))))

    cost = pl.CostEstimate(
        flops=4 * R * D * H + (R * D if skip_connect else 0),
        transcendentals=R * H,
        bytes_accessed=2 * R * D * x_is + 2 * D * H * w_is + (H + D) * 4)

    kernel = functools.partial(adapter_kernel, skip_connect=skip_connect,
                               approximate_gelu=approximate_gelu)

    def _call(single_buffer_weights):
        if single_buffer_weights:
            def resident(shape):
                return pl.BlockSpec(shape, lambda i: (0,) * len(shape),
                                    pipeline_mode=pl.Buffered(1))
        else:
            def resident(shape):
                return pl.BlockSpec(shape, lambda i: (0,) * len(shape))

        return pl.pallas_call(
            kernel,
            out_shape=jax.ShapeDtypeStruct((R, D), x.dtype),
            grid_spec=pltpu.PrefetchScalarGridSpec(
                num_scalar_prefetch=0,
                grid=(grid_steps,),
                in_specs=[
                    pl.BlockSpec((tile_r, D), lambda i: (i, 0)),   # x row-tile
                    resident((D, H)),                              # W1 (resident)
                    resident((1, H)),                              # b1
                    resident((H, D)),                              # W2 (resident)
                    resident((1, D)),                              # b2
                ],
                out_specs=pl.BlockSpec((tile_r, D), lambda i: (i, 0)),
            ),
            compiler_params=pltpu.CompilerParams(
                dimension_semantics=("parallel",),
                vmem_limit_bytes=vmem_limit),
            cost_estimate=cost,
        )(x2, w1c, b1r, w2c, b2r)

    try:
        out = _call(True)      # single-buffer the resident weights/biases
    except Exception:
        out = _call(False)     # fallback: default double buffering

    return out.reshape(orig_shape)


def init_adapter_params(key, D_features, mlp_ratio=0.25, dtype=jnp.float32):
    """Deterministic init mimicking nn.Linear defaults (uniform +-1/sqrt(fan_in))."""
    H = int(D_features * mlp_ratio)
    k1, k2, k3, k4 = jax.random.split(key, 4)
    bound1 = 1.0 / (D_features ** 0.5)
    bound2 = 1.0 / (H ** 0.5)
    # stored as (in, out) so the kernel does x @ W
    w1 = jax.random.uniform(k1, (D_features, H), dtype, -bound1, bound1)
    b1 = jax.random.uniform(k2, (H,), dtype, -bound1, bound1)
    w2 = jax.random.uniform(k3, (H, D_features), dtype, -bound2, bound2)
    b2 = jax.random.uniform(k4, (D_features,), dtype, -bound2, bound2)
    return w1, b1, w2, b2


def adapter_reference(x, w1, b1, w2, b2, skip_connect=True):
    xs = jax.nn.gelu(x @ w1 + b1, approximate=False) @ w2 + b2
    return x + xs if skip_connect else xs


if __name__ == "__main__":
    key = jax.random.PRNGKey(0)
    kx, kp = jax.random.split(key)

    # Small shapes consistent with the module: (batch=2, seq=8, D_features=32).
    D_features = 32
    x = jax.random.normal(kx, (2, 8, D_features), dtype=jnp.float32)
    w1, b1, w2, b2 = init_adapter_params(kp, D_features, mlp_ratio=0.25)
    ref = adapter_reference(x, w1, b1, w2, b2, skip_connect=True)

    # Default fast path: bf16 matmuls, f32 accumulation / bias / GELU / residual.
    out = jax.block_until_ready(adapter_forward(x, w1, b1, w2, b2, skip_connect=True))
    assert out.shape == x.shape and out.dtype == x.dtype
    assert jnp.allclose(out, ref, atol=3e-2, rtol=3e-2), "bf16 path mismatch"

    # Exact-parity f32 path (same semantics as the PyTorch module).
    out_f32 = jax.block_until_ready(
        adapter_forward(x, w1, b1, w2, b2, skip_connect=True,
                        compute_dtype=None, approximate_gelu=False))
    assert jnp.allclose(out_f32, ref, atol=1e-5, rtol=1e-5), "f32 path mismatch"

    # Ragged rows (R = 21 is not a multiple of the row tile): cdiv grid with a
    # partial last block, no host-side pad / slice.
    x_odd = jax.random.normal(kx, (3, 7, D_features), dtype=jnp.float32)
    out_odd = jax.block_until_ready(
        adapter_forward(x_odd, w1, b1, w2, b2, skip_connect=True,
                        compute_dtype=None, approximate_gelu=False))
    ref_odd = adapter_reference(x_odd, w1, b1, w2, b2, skip_connect=True)
    assert jnp.allclose(out_odd, ref_odd, atol=1e-5, rtol=1e-5), "ragged mismatch"

    print("KERNEL_OK")
</pallas_src>

<mosaic_0001>
module attributes {stable_mosaic.version = 11 : i64} {
  func.func @adapter_kernel(%arg0: i32, %arg1: memref<8x32xf32, #tpu.memory_space<vmem>>, %arg2: memref<32x8xbf16, #tpu.memory_space<vmem>>, %arg3: memref<1x8xf32, #tpu.memory_space<vmem>>, %arg4: memref<8x32xbf16, #tpu.memory_space<vmem>>, %arg5: memref<1x32xf32, #tpu.memory_space<vmem>>, %arg6: memref<8x32xf32, #tpu.memory_space<vmem>>) attributes {dimension_semantics = [#tpu.dimension_semantics<parallel>], iteration_bounds = array<i64: 2>, scalar_prefetch = 0 : i64, scratch_operands = 0 : i64, tpu.core_type = #tpu.core_type<tc>, window_params = [{transform_indices = @transform_0, window_bounds = array<i64: 8, 32>}, {pipeline_mode = #tpu.pipeline_mode<synchronous>, transform_indices = @transform_1, window_bounds = array<i64: 32, 8>}, {pipeline_mode = #tpu.pipeline_mode<synchronous>, transform_indices = @transform_2, window_bounds = array<i64: 1, 8>}, {pipeline_mode = #tpu.pipeline_mode<synchronous>, transform_indices = @transform_3, window_bounds = array<i64: 8, 32>}, {pipeline_mode = #tpu.pipeline_mode<synchronous>, transform_indices = @transform_4, window_bounds = array<i64: 1, 32>}, {transform_indices = @transform_5, window_bounds = array<i64: 8, 32>}]} {
    %c0 = arith.constant 0 : index
    %c0_0 = arith.constant 0 : index
    %0 = vector.load %arg1[%c0, %c0_0] : memref<8x32xf32, #tpu.memory_space<vmem>>, vector<8x32xf32>
    %1 = arith.truncf %0 : vector<8x32xf32> to vector<8x32xbf16>
    %c0_1 = arith.constant 0 : index
    %c0_2 = arith.constant 0 : index
    %2 = vector.load %arg2[%c0_1, %c0_2] : memref<32x8xbf16, #tpu.memory_space<vmem>>, vector<32x8xbf16>
    %cst = arith.constant dense<0.000000e+00> : vector<8x8xf32>
    %3 = tpu.matmul %1, %2, %cst {dimension_numbers = #tpu.dot_dimension_numbers<[1], [0], [0], [1], [0, 0, 1, 1], [], []>} : vector<8x32xbf16>, vector<32x8xbf16>, vector<8x8xf32> -> vector<8x8xf32>
    %c0_3 = arith.constant 0 : index
    %c0_4 = arith.constant 0 : index
    %4 = vector.load %arg3[%c0_3, %c0_4] : memref<1x8xf32, #tpu.memory_space<vmem>>, vector<1x8xf32>
    %5 = vector.broadcast %4 : vector<1x8xf32> to vector<8x8xf32>
    %6 = arith.addf %3, %5 : vector<8x8xf32>
    %7 = arith.mulf %6, %6 : vector<8x8xf32>
    %8 = arith.mulf %6, %7 : vector<8x8xf32>
    %cst_5 = arith.constant 4.471500e-02 : f32
    %9 = vector.broadcast %cst_5 : f32 to vector<8x8xf32>
    %10 = arith.mulf %9, %8 : vector<8x8xf32>
    %11 = arith.addf %6, %10 : vector<8x8xf32>
    %cst_6 = arith.constant 0.797884583 : f32
    %12 = vector.broadcast %cst_6 : f32 to vector<8x8xf32>
    %13 = arith.mulf %12, %11 : vector<8x8xf32>
    %14 = math.tanh %13 : vector<8x8xf32>
    %cst_7 = arith.constant 1.000000e+00 : f32
    %15 = vector.broadcast %cst_7 : f32 to vector<8x8xf32>
    %16 = arith.addf %15, %14 : vector<8x8xf32>
    %cst_8 = arith.constant 5.000000e-01 : f32
    %17 = vector.broadcast %cst_8 : f32 to vector<8x8xf32>
    %18 = arith.mulf %17, %16 : vector<8x8xf32>
    %19 = arith.mulf %6, %18 : vector<8x8xf32>
    %20 = arith.truncf %19 : vector<8x8xf32> to vector<8x8xbf16>
    %c0_9 = arith.constant 0 : index
    %c0_10 = arith.constant 0 : index
    %21 = vector.load %arg4[%c0_9, %c0_10] : memref<8x32xbf16, #tpu.memory_space<vmem>>, vector<8x32xbf16>
    %cst_11 = arith.constant dense<0.000000e+00> : vector<8x32xf32>
    %22 = tpu.matmul %20, %21, %cst_11 {dimension_numbers = #tpu.dot_dimension_numbers<[1], [0], [0], [1], [0, 0, 1, 1], [], []>} : vector<8x8xbf16>, vector<8x32xbf16>, vector<8x32xf32> -> vector<8x32xf32>
    %c0_12 = arith.constant 0 : index
    %c0_13 = arith.constant 0 : index
    %23 = vector.load %arg5[%c0_12, %c0_13] : memref<1x32xf32, #tpu.memory_space<vmem>>, vector<1x32xf32>
    %24 = vector.broadcast %23 : vector<1x32xf32> to vector<8x32xf32>
    %25 = arith.addf %22, %24 : vector<8x32xf32>
    %26 = arith.addf %25, %0 : vector<8x32xf32>
    %c0_14 = arith.constant 0 : index
    %c0_15 = arith.constant 0 : index
    %27 = vector.load %arg6[%c0_14, %c0_15] : memref<8x32xf32, #tpu.memory_space<vmem>>, vector<8x32xf32>
    tpu.vector_store %arg6[%c0_14, %c0_15], %26 {strides = array<i32>} : memref<8x32xf32, #tpu.memory_space<vmem>>, vector<8x32xf32>,
    return
  }
  func.func @transform_0(%arg0: i32) -> (i32, i32) {
    %c0_i32 = arith.constant 0 : i32
    %c0_i32_0 = arith.constant 0 : i32
    return %arg0, %c0_i32 : i32, i32
  }
  func.func @transform_1(%arg0: i32) -> (i32, i32) {
    %c0_i32 = arith.constant 0 : i32
    %c0_i32_0 = arith.constant 0 : i32
    %c0_i32_1 = arith.constant 0 : i32
    return %c0_i32, %c0_i32_0 : i32, i32
  }
  func.func @transform_2(%arg0: i32) -> (i32, i32) {
    %c0_i32 = arith.constant 0 : i32
    %c0_i32_0 = arith.constant 0 : i32
    %c0_i32_1 = arith.constant 0 : i32
    return %c0_i32, %c0_i32_0 : i32, i32
  }
  func.func @transform_3(%arg0: i32) -> (i32, i32) {
    %c0_i32 = arith.constant 0 : i32
    %c0_i32_0 = arith.constant 0 : i32
    %c0_i32_1 = arith.constant 0 : i32
    return %c0_i32, %c0_i32_0 : i32, i32
  }
  func.func @transform_4(%arg0: i32) -> (i32, i32) {
    %c0_i32 = arith.constant 0 : i32
    %c0_i32_0 = arith.constant 0 : i32
    %c0_i32_1 = arith.constant 0 : i32
    return %c0_i32, %c0_i32_0 : i32, i32
  }
  func.func @transform_5(%arg0: i32) -> (i32, i32) {
    %c0_i32 = arith.constant 0 : i32
    %c0_i32_0 = arith.constant 0 : i32
    return %arg0, %c0_i32 : i32, i32
  }
}

module attributes {stable_mosaic.version = 11 : i64} {
  func.func @adapter_kernel(%arg0: i32, %arg1: memref<8x32xf32, #tpu.memory_space<vmem>>, %arg2: memref<32x8xbf16, #tpu.memory_space<vmem>>, %arg3: memref<1x8xf32, #tpu.memory_space<vmem>>, %arg4: memref<8x32xbf16, #tpu.memory_space<vmem>>, %arg5: memref<1x32xf32, #tpu.memory_space<vmem>>, %arg6: memref<8x32xf32, #tpu.memory_space<vmem>>) attributes {dimension_semantics = [#tpu.dimension_semantics<parallel>], iteration_bounds = array<i64: 2>, scalar_prefetch = 0 : i64, scratch_operands = 0 : i64, tpu.core_type = #tpu.core_type<tc>, window_params = [{transform_indices = @transform_0, window_bounds = array<i64: 8, 32>}, {pipeline_mode = #tpu.pipeline_mode<synchronous>, transform_indices = @transform_1, window_bounds = array<i64: 32, 8>}, {pipeline_mode = #tpu.pipeline_mode<synchronous>, transform_indices = @transform_2, window_bounds = array<i64: 1, 8>}, {pipeline_mode = #tpu.pipeline_mode<synchronous>, transform_indices = @transform_3, window_bounds = array<i64: 8, 32>}, {pipeline_mode = #tpu.pipeline_mode<synchronous>, transform_indices = @transform_4, window_bounds = array<i64: 1, 32>}, {transform_indices = @transform_5, window_bounds = array<i64: 8, 32>}]} {
    %c0 = arith.constant 0 : index
    %c0_0 = arith.constant 0 : index
    %0 = vector.load %arg1[%c0, %c0_0] : memref<8x32xf32, #tpu.memory_space<vmem>>, vector<8x32xf32>
    %1 = arith.truncf %0 : vector<8x32xf32> to vector<8x32xbf16>
    %c0_1 = arith.constant 0 : index
    %c0_2 = arith.constant 0 : index
    %2 = vector.load %arg2[%c0_1, %c0_2] : memref<32x8xbf16, #tpu.memory_space<vmem>>, vector<32x8xbf16>
    %cst = arith.constant dense<0.000000e+00> : vector<8x8xf32>
    %3 = tpu.matmul %1, %2, %cst {dimension_numbers = #tpu.dot_dimension_numbers<[1], [0], [0], [1], [0, 0, 1, 1], [], []>} : vector<8x32xbf16>, vector<32x8xbf16>, vector<8x8xf32> -> vector<8x8xf32>
    %c0_3 = arith.constant 0 : index
    %c0_4 = arith.constant 0 : index
    %4 = vector.load %arg3[%c0_3, %c0_4] : memref<1x8xf32, #tpu.memory_space<vmem>>, vector<1x8xf32>
    %5 = vector.broadcast %4 : vector<1x8xf32> to vector<8x8xf32>
    %6 = arith.addf %3, %5 : vector<8x8xf32>
    %7 = arith.mulf %6, %6 : vector<8x8xf32>
    %8 = arith.mulf %6, %7 : vector<8x8xf32>
    %cst_5 = arith.constant 4.471500e-02 : f32
    %9 = vector.broadcast %cst_5 : f32 to vector<8x8xf32>
    %10 = arith.mulf %9, %8 : vector<8x8xf32>
    %11 = arith.addf %6, %10 : vector<8x8xf32>
    %cst_6 = arith.constant 0.797884583 : f32
    %12 = vector.broadcast %cst_6 : f32 to vector<8x8xf32>
    %13 = arith.mulf %12, %11 : vector<8x8xf32>
    %14 = math.tanh %13 : vector<8x8xf32>
    %cst_7 = arith.constant 1.000000e+00 : f32
    %15 = vector.broadcast %cst_7 : f32 to vector<8x8xf32>
    %16 = arith.addf %15, %14 : vector<8x8xf32>
    %cst_8 = arith.constant 5.000000e-01 : f32
    %17 = vector.broadcast %cst_8 : f32 to vector<8x8xf32>
    %18 = arith.mulf %17, %16 : vector<8x8xf32>
    %19 = arith.mulf %6, %18 : vector<8x8xf32>
    %20 = arith.truncf %19 : vector<8x8xf32> to vector<8x8xbf16>
    %c0_9 = arith.constant 0 : index
    %c0_10 = arith.constant 0 : index
    %21 = vector.load %arg4[%c0_9, %c0_10] : memref<8x32xbf16, #tpu.memory_space<vmem>>, vector<8x32xbf16>
    %cst_11 = arith.constant dense<0.000000e+00> : vector<8x32xf32>
    %22 = tpu.matmul %20, %21, %cst_11 {dimension_numbers = #tpu.dot_dimension_numbers<[1], [0], [0], [1], [0, 0, 1, 1], [], []>} : vector<8x8xbf16>, vector<8x32xbf16>, vector<8x32xf32> -> vector<8x32xf32>
    %c0_12 = arith.constant 0 : index
    %c0_13 = arith.constant 0 : index
    %23 = vector.load %arg5[%c0_12, %c0_13] : memref<1x32xf32, #tpu.memory_space<vmem>>, vector<1x32xf32>
    %24 = vector.broadcast %23 : vector<1x32xf32> to vector<8x32xf32>
    %25 = arith.addf %22, %24 : vector<8x32xf32>
    %26 = arith.addf %25, %0 : vector<8x32xf32>
    %c0_14 = arith.constant 0 : index
    %c0_15 = arith.constant 0 : index
    %27 = vector.load %arg6[%c0_14, %c0_15] : memref<8x32xf32, #tpu.memory_space<vmem>>, vector<8x32xf32>
    tpu.vector_store %arg6[%c0_14, %c0_15], %26 {strides = array<i32>} : memref<8x32xf32, #tpu.memory_space<vmem>>, vector<8x32xf32>,
    return
  }
  func.func @transform_0(%arg0: i32) -> (i32, i32) {
    %c0_i32 = arith.constant 0 : i32
    %c0_i32_0 = arith.constant 0 : i32
    return %arg0, %c0_i32 : i32, i32
  }
  func.func @transform_1(%arg0: i32) -> (i32, i32) {
    %c0_i32 = arith.constant 0 : i32
    %c0_i32_0 = arith.constant 0 : i32
    %c0_i32_1 = arith.constant 0 : i32
    return %c0_i32, %c0_i32_0 : i32, i32
  }
  func.func @transform_2(%arg0: i32) -> (i32, i32) {
    %c0_i32 = arith.constant 0 : i32
    %c0_i32_0 = arith.constant 0 : i32
    %c0_i32_1 = arith.constant 0 : i32
    return %c0_i32, %c0_i32_0 : i32, i32
  }
  func.func @transform_3(%arg0: i32) -> (i32, i32) {
    %c0_i32 = arith.constant 0 : i32
    %c0_i32_0 = arith.constant 0 : i32
    %c0_i32_1 = arith.constant 0 : i32
    return %c0_i32, %c0_i32_0 : i32, i32
  }
  func.func @transform_4(%arg0: i32) -> (i32, i32) {
    %c0_i32 = arith.constant 0 : i32
    %c0_i32_0 = arith.constant 0 : i32
    %c0_i32_1 = arith.constant 0 : i32
    return %c0_i32, %c0_i32_0 : i32, i32
  }
  func.func @transform_5(%arg0: i32) -> (i32, i32) {
    %c0_i32 = arith.constant 0 : i32
    %c0_i32_0 = arith.constant 0 : i32
    return %arg0, %c0_i32 : i32, i32
  }
}

</mosaic_0001>

<llo_original>
// kernel: tpu_custom_call.1
$region0: #{tpu_custom_call.1}
  #allocation0 [shape = 'u32[]', space=smem, size = 0x4, offset = 0x4, fixed_abs, tag = 'smem constant byte address 0x4 - core index']
  #allocation1 [shape = 'u32[72,128]{1,0:T(1,128)}', space=vmem, size = 0x9000, scoped, tag = 'internal scratch']
  %s0 = inlined_call_operand.vmem [shape: f32[16,32], index: 0, kind: input, shape index: {}]
  %s1 = inlined_call_operand.vmem [shape: bf16[32,8], index: 1, kind: input, shape index: {}]
  %s2 = inlined_call_operand.vmem [shape: f32[1,8], index: 2, kind: input, shape index: {}]
  %s3 = inlined_call_operand.vmem [shape: bf16[8,32], index: 3, kind: input, shape index: {}]
  %s4 = inlined_call_operand.vmem [shape: f32[1,32], index: 4, kind: input, shape index: {}]
  %s5 = inlined_call_operand.hbm [shape: f32[16,32], index: 5, kind: output, shape index: {}]
  %s6 = sld [smem:[#allocation0]]
  $region53: #{tpu_custom_call.1} parent=0
    _
  %s8 = ssub.s32 1, %s6
  %s9 = scalar_select 0, %s8, %s6
  $region1: #{tpu_custom_call.1} parent=0
    #allocation2 [shape = 'u8[8192]{0}', space=vmem, size = 0x2000, scoped, tag = 'output window, operand 0']
    #allocation3 [shape = 's32[2]{0}', space=sflag, size = 0x8, scoped, tag = 'scoped memory for tpu_custom_call.1']
    %10 = vsyncpa [#allocation3], 0
    %s11 = scalar_lea.sflag [#allocation3], 1
    %12 = vsyncpa %s11, 0
    loop: start=0, step=1, limit=4
    $region2: #{tpu_custom_call.1} parent=1 // loop_pre_header
      _
    $region3: #{tpu_custom_call.1} parent=1 // loop_header
      %s14 = sphi 0, %s18
      %p15 = scmp.ge.s32.totalorder %s14, 4
      %s24 = sphi 0, %s26
      %s27 = sphi 0, %s24
      %s28 = sphi 0, %s27
      %s44 = sphi 0, %s28
      %s48 = sphi 0, %s48
      %s50 = sphi 0, %s48
      %s51 = sphi 0, %s50
      %s65 = sphi 0, %s51
      %s69 = sphi 0, %s69
      %s71 = sphi 0, %s69
      %s72 = sphi 0, %s71
      %s86 = sphi 0, %s72
      %s90 = sphi 0, %s90
      %s92 = sphi 0, %s90
      %s93 = sphi 0, %s92
      %s107 = sphi 0, %s93
      %s111 = sphi 0, %s111
      %s113 = sphi 0, %s111
      %s114 = sphi 0, %s113
      %s128 = sphi 0, %s114
      %s134 = sphi 0, %s136
      %s137 = sphi 0, %s134
      %s138 = sphi 0, %s137
      %s154 = sphi 0, %s138
    $region4: #{tpu_custom_call.1} parent=1 // loop_header_branch
      %17 = sbr.rel (%p15) target = $region8
    $region5: #{tpu_custom_call.1} parent=1 // loop_body
      %s19 = ssub.s32 %s14, 1
      %s20 = ssub.s32 %s14, 2
      %s21 = sadd.s32 %s14, 1
      %s22 = ssub.s32 %s14, %s21
      %p23 = scmp.eq.s32.totalorder %s22, 0
      %s25 = sadd.s32 %s24, 1
      %s26 = scalar_select %p23, %s24, %s25
      %p29 = pneg %p23
      %p30 = scmp.eq.s32.totalorder %s14, 1
      %p31 = por %p29, %p30
      %p32 = scmp.ne.s32.totalorder %s24, %s27
      %p33 = scmp.eq.s32.totalorder %s14, 0
      %p34 = por %p32, %p33
      %p35 = scmp.ne.s32.totalorder %s24, %s27
      %p36 = scmp.eq.s32.totalorder %s19, 1
      %p37 = por %p35, %p36
      %p38 = scmp.ne.s32.totalorder %s27, %s28
      %p39 = scmp.eq.s32.totalorder %s19, 0
      %p40 = por %p38, %p39
      %p41 = scmp.ne.s32.totalorder %s27, %s28
      %p42 = scmp.eq.s32.totalorder %s20, 1
      %p43 = por %p41, %p42
      %p45 = scmp.ne.s32.totalorder %s28, %s44
      %p46 = scmp.eq.s32.totalorder %s20, 0
      %p47 = por %p45, %p46
      %s49 = sadd.s32 %s48, 1
      %p52 = scmp.eq.s32.totalorder %s14, 1
      %p53 = scmp.ne.s32.totalorder %s48, %s50
      %p54 = scmp.eq.s32.totalorder %s14, 0
      %p55 = por %p53, %p54
      %p56 = scmp.ne.s32.totalorder %s48, %s50
      %p57 = scmp.eq.s32.totalorder %s19, 1
      %p58 = por %p56, %p57
      %p59 = scmp.ne.s32.totalorder %s50, %s51
      %p60 = scmp.eq.s32.totalorder %s19, 0
      %p61 = por %p59, %p60
      %p62 = scmp.ne.s32.totalorder %s50, %s51
      %p63 = scmp.eq.s32.totalorder %s20, 1
      %p64 = por %p62, %p63
      %p66 = scmp.ne.s32.totalorder %s51, %s65
      %p67 = scmp.eq.s32.totalorder %s20, 0
      %p68 = por %p66, %p67
      %s70 = sadd.s32 %s69, 1
      %p73 = scmp.eq.s32.totalorder %s14, 1
      %p74 = scmp.ne.s32.totalorder %s69, %s71
      %p75 = scmp.eq.s32.totalorder %s14, 0
      %p76 = por %p74, %p75
      %p77 = scmp.ne.s32.totalorder %s69, %s71
      %p78 = scmp.eq.s32.totalorder %s19, 1
      %p79 = por %p77, %p78
      %p80 = scmp.ne.s32.totalorder %s71, %s72
      %p81 = scmp.eq.s32.totalorder %s19, 0
      %p82 = por %p80, %p81
      %p83 = scmp.ne.s32.totalorder %s71, %s72
      %p84 = scmp.eq.s32.totalorder %s20, 1
      %p85 = por %p83, %p84
      %p87 = scmp.ne.s32.totalorder %s72, %s86
      %p88 = scmp.eq.s32.totalorder %s20, 0
      %p89 = por %p87, %p88
      %s91 = sadd.s32 %s90, 1
      %p94 = scmp.eq.s32.totalorder %s14, 1
      %p95 = scmp.ne.s32.totalorder %s90, %s92
      %p96 = scmp.eq.s32.totalorder %s14, 0
      %p97 = por %p95, %p96
      %p98 = scmp.ne.s32.totalorder %s90, %s92
      %p99 = scmp.eq.s32.totalorder %s19, 1
      %p100 = por %p98, %p99
      %p101 = scmp.ne.s32.totalorder %s92, %s93
      %p102 = scmp.eq.s32.totalorder %s19, 0
      %p103 = por %p101, %p102
      %p104 = scmp.ne.s32.totalorder %s92, %s93
      %p105 = scmp.eq.s32.totalorder %s20, 1
      %p106 = por %p104, %p105
      %p108 = scmp.ne.s32.totalorder %s93, %s107
      %p109 = scmp.eq.s32.totalorder %s20, 0
      %p110 = por %p108, %p109
      %s112 = sadd.s32 %s111, 1
      %p115 = scmp.eq.s32.totalorder %s14, 1
      %p116 = scmp.ne.s32.totalorder %s111, %s113
      %p117 = scmp.eq.s32.totalorder %s14, 0
      %p118 = por %p116, %p117
      %p119 = scmp.ne.s32.totalorder %s111, %s113
      %p120 = scmp.eq.s32.totalorder %s19, 1
      %p121 = por %p119, %p120
      %p122 = scmp.ne.s32.totalorder %s113, %s114
      %p123 = scmp.eq.s32.totalorder %s19, 0
      %p124 = por %p122, %p123
      %p125 = scmp.ne.s32.totalorder %s113, %s114
      %p126 = scmp.eq.s32.totalorder %s20, 1
      %p127 = por %p125, %p126
      %p129 = scmp.ne.s32.totalorder %s114, %s128
      %p130 = scmp.eq.s32.totalorder %s20, 0
      %p131 = por %p129, %p130
      %s132 = ssub.s32 %s14, %s21
      %p133 = scmp.eq.s32.totalorder %s132, 0
      %s135 = sadd.s32 %s134, 1
      %s136 = scalar_select %p133, %s134, %s135
      %p139 = pneg %p133
      %p140 = scmp.eq.s32.totalorder %s14, 1
      %p141 = por %p139, %p140
      %p142 = scmp.ne.s32.totalorder %s134, %s137
      %p143 = scmp.eq.s32.totalorder %s14, 0
      %p144 = por %p142, %p143
      %p145 = scmp.ne.s32.totalorder %s134, %s137
      %p146 = scmp.eq.s32.totalorder %s19, 1
      %p147 = por %p145, %p146
      %p148 = scmp.ne.s32.totalorder %s137, %s138
      %p149 = scmp.eq.s32.totalorder %s19, 0
      %p150 = por %p148, %p149
      %p151 = scmp.ne.s32.totalorder %s137, %s138
      %p152 = scmp.eq.s32.totalorder %s20, 1
      %p153 = por %p151, %p152
      %p155 = scmp.ne.s32.totalorder %s138, %s154
      %p156 = scmp.eq.s32.totalorder %s20, 0
      %p157 = por %p155, %p156
      %p158 = scmp.le.s32.totalorder 1, %s14
      %p159 = scmp.lt.s32.totalorder %s14, 3
      %p160 = pnand %p158, %p159
      %p161 = pneg %p160
      // Predicated region
      $region9: #{tpu_custom_call.1} parent=5 // pred_check
        _
      $region10: #{tpu_custom_call.1} parent=5 // pred_check_branch
        %163 = sbr.rel (%p160) target = $region12
      $region11: #{tpu_custom_call.1} parent=5 // pred_region
        %s164 = ssub.s32 %s14, 1
        // Predicated region
        $region13: #{tpu_custom_call.1} parent=11 // pred_check
          %p165 = pneg %p61
        $region14: #{tpu_custom_call.1} parent=11 // pred_check_branch
          %167 = sbr.rel (%p165) target = $region16
        $region15: #{tpu_custom_call.1} parent=11 // pred_region
          _
        $region16: #{tpu_custom_call.1} parent=11 // pred_fallthru
          _
        // Predicated region
        $region17: #{tpu_custom_call.1} parent=11 // pred_check
          %p168 = pneg %p82
        $region18: #{tpu_custom_call.1} parent=11 // pred_check_branch
          %170 = sbr.rel (%p168) target = $region20
        $region19: #{tpu_custom_call.1} parent=11 // pred_region
          _
        $region20: #{tpu_custom_call.1} parent=11 // pred_fallthru
          _
        // Predicated region
        $region21: #{tpu_custom_call.1} parent=11 // pred_check
          %p171 = pneg %p103
        $region22: #{tpu_custom_call.1} parent=11 // pred_check_branch
          %173 = sbr.rel (%p171) target = $region24
        $region23: #{tpu_custom_call.1} parent=11 // pred_region
          _
        $region24: #{tpu_custom_call.1} parent=11 // pred_fallthru
          _
        // Predicated region
        $region25: #{tpu_custom_call.1} parent=11 // pred_check
          %p174 = pneg %p124
        $region26: #{tpu_custom_call.1} parent=11 // pred_check_branch
          %176 = sbr.rel (%p174) target = $region28
        $region27: #{tpu_custom_call.1} parent=11 // pred_region
          _
        $region28: #{tpu_custom_call.1} parent=11 // pred_fallthru
          _
      $region12: #{tpu_custom_call.1} parent=5 // pred_fallthru
        _
      %p177 = scmp.lt.s32.totalorder %s14, 2
      // Predicated region
      $region29: #{tpu_custom_call.1} parent=5 // pred_check
        %p178 = pneg %p177
      $region30: #{tpu_custom_call.1} parent=5 // pred_check_branch
        %180 = sbr.rel (%p178) target = $region32
      $region31: #{tpu_custom_call.1} parent=5 // pred_region
        // Predicated region
        $region33: #{tpu_custom_call.1} parent=31 // pred_check
          %p181 = pneg %p34
        $region34: #{tpu_custom_call.1} parent=31 // pred_check_branch
          %183 = sbr.rel (%p181) target = $region36
        $region35: #{tpu_custom_call.1} parent=31 // pred_region
          %p184 = scmp.lt.s32.totalorder %s14, 1
          %s185 = scalar_select %p184, %s14, 1
          %s186 = smul.addr %s185, 8
          %s187 = scalar_lea.vmem %s0, %s186
        $region36: #{tpu_custom_call.1} parent=31 // pred_fallthru
          _
      $region32: #{tpu_custom_call.1} parent=5 // pred_fallthru
        _
      %p188 = scmp.le.s32.totalorder 1, %s14
      %p189 = scmp.lt.s32.totalorder %s14, 3
      %p190 = pnand %p188, %p189
      %p191 = pneg %p190
      // Predicated region
      $region37: #{tpu_custom_call.1} parent=5 // pred_check
        _
      $region38: #{tpu_custom_call.1} parent=5 // pred_check_branch
        %193 = sbr.rel (%p190) target = $region40
      $region39: #{tpu_custom_call.1} parent=5 // pred_region
        %s194 = ssub.s32 %s14, 1
        %p195 = scmp.lt.s32.totalorder %s19, 1
        %s196 = scalar_select %p195, %s19, 1
        %s197 = smul.addr %s196, 8
        %s198 = scalar_lea.vmem %s0, %s197
        %p199 = pneg %p40
        %p200 = pneg %p37
        %p201 = pneg %p61
        %p202 = pneg %p58
        %p203 = pneg %p82
        %p204 = pneg %p79
        %p205 = pneg %p103
        %p206 = pneg %p100
        %p207 = pneg %p124
        %p208 = pneg %p121
        %p209 = pneg %p150
        %p210 = pneg %p147
        %s211 = sand.u32 %s137, 1
        %s212 = scalar_lea.sflag [#allocation3], %s211
        %s213 = sand.u32 %s137, 1
        %s214 = smul.addr %s213, 8
        %s215 = scalar_lea.vmem [#allocation2], %s214
        %p216 = scmp.lt.s32.totalorder %s19, 1
        %s217 = scalar_select %p216, %s19, 1
        %s218 = smul.addr %s217, 8
        %s219 = scalar_lea.vmem %s0, %s218
        %v221 = vld [vmem:[%s219] sm:$0xff]
        %v222 = vpack.c.bf16 %v221, %v221
        %v223 = vld [vmem:[%s1] sm:$0xf]
        %v224 = vld [vmem:[%s1 + $0x4] sm:$0xf]
        %v225 = vld [vmem:[%s1 + $0x8] sm:$0xf]
        %v226 = vld [vmem:[%s1 + $0xc] sm:$0xf]
        %v227 = vld [vmem:[%s2] sm:$0x1]
        %v229 = vperm.slane %v227, 0
        %v235 = vunpack.c.l.b16 %v223
        %v236 = vunpack.c.l.b16 %v224
        %v237 = vunpack.c.l.b16 %v225
        %v238 = vunpack.c.l.b16 %v226
        %v239 = vpack.c.b16 %v236, %v235
        %v240 = vpack.c.b16 %v238, %v237
        %vm243 = vcmask 261120
        %v245 = vsel %vm243, %v222, 0
        %247 = vmatpush.bf16.msra.mxu0 0
        %248 = vmatpush.bf16.msra.mxu0 0
        %249 = vmatpush.bf16.msra.mxu0 0
        %250 = vmatpush.bf16.msra.mxu0 0
        %251 = vmatpush.bf16.msra.mxu0 0
        %252 = vmatpush.bf16.msra.mxu0 0
        %253 = vmatpush.bf16.msra.mxu0 %v240
        %254 = vmatpush.bf16.msra.mxu0 %v239
        %255 = vmatmul.bf16.gmra.mxu0 %v245
        %v256 = vpop.f32.mrf.mxu0
        %v257 = vadd.f32 %v229, %v256
        %v258 = vpop.f32.mrf.mxu0
        %259 = vdwg.mxu0
        %v260 = vmul.f32 %v257, %v257
        %v261 = vmul.f32 %v257, %v260
        %v262 = vmul.f32 %v261, 0.044715
        %v263 = vadd.f32 %v257, %v262
        %v264 = vmul.f32 %v263, 0.7978846
        %v265 = vtanh.pop %v264
        %v266 = vadd.f32 %v265, 1.0
        %v267 = vmul.f32 %v266, 0.5
        %v268 = vmul.f32 %v257, %v267
        %v269 = vpack.c.bf16 %v268, %v268
        %v270 = vld [vmem:[%s3] sm:$0xf]
        %v271 = vld [vmem:[%s4] sm:$0x1]
        %v273 = vperm.slane %v271, 0
        %vm275 = vcmask 64512
        %v277 = vsel %vm275, %v269, 0
        %vm279 = vcmask 1043456
        %v281 = vsel %vm279, %v270, 0
        %283 = vmatpush.bf16.msra.mxu0 0
        %284 = vmatpush.bf16.msra.mxu0 0
        %285 = vmatpush.bf16.msra.mxu0 0
        %286 = vmatpush.bf16.msra.mxu0 0
        %287 = vmatpush.bf16.msra.mxu0 0
        %288 = vmatpush.bf16.msra.mxu0 0
        %289 = vmatpush.bf16.msra.mxu0 0
        %290 = vmatpush.bf16.msra.mxu0 %v281
        %291 = vmatmul.bf16.gmra.mxu0 %v277
        %v292 = vpop.f32.mrf.mxu0
        %v293 = vadd.f32 %v273, %v292
        %v294 = vpop.f32.mrf.mxu0
        %295 = vdwg.mxu0
        %v296 = vadd.f32 %v293, %v221
        %297 = vst.msk [vmem:[%s215] sm:$0xff] %vm243, %v296
        %s298 = sand.u32 %s137, 1
        %s299 = scalar_lea.sflag [#allocation3], %s298
        %s300 = sand.u32 %s137, 1
        %s301 = smul.addr %s300, 8
        %s302 = scalar_lea.vmem [#allocation2], %s301
        // Predicated region
        $region41: #{tpu_custom_call.1} parent=39 // pred_check
          %p303 = pneg %p147
        $region42: #{tpu_custom_call.1} parent=39 // pred_check_branch
          %305 = sbr.rel (%p303) target = $region44
        $region43: #{tpu_custom_call.1} parent=39 // pred_region
          %307 = vsyncadd %s299, 0
          %s308 = smul.addr %s19, 8
          %s309 = scalar_lea.hbm %s5, %s308
          %s311 = sshll.u32 %s302, 4
          %s312 = int_to_ptr.vmem [resolvable:$true] %s311
          %s313 = sshll.u32 %s309, 4
          %s314 = int_to_ptr.hbm [resolvable:$true] %s313
          %316 = dma.vmem_to_hbm [thread:$0]  %s312, 128, %s314, %s299
        $region44: #{tpu_custom_call.1} parent=39 // pred_fallthru
          _
      $region40: #{tpu_custom_call.1} parent=5 // pred_fallthru
        _
      %p317 = scmp.le.s32.totalorder 2, %s14
      // Predicated region
      $region45: #{tpu_custom_call.1} parent=5 // pred_check
        %p318 = pneg %p317
      $region46: #{tpu_custom_call.1} parent=5 // pred_check_branch
        %320 = sbr.rel (%p318) target = $region48
      $region47: #{tpu_custom_call.1} parent=5 // pred_region
        %s321 = ssub.s32 %s14, 2
        // Predicated region
        $region49: #{tpu_custom_call.1} parent=47 // pred_check
          %p322 = pneg %p153
        $region50: #{tpu_custom_call.1} parent=47 // pred_check_branch
          %324 = sbr.rel (%p322) target = $region52
        $region51: #{tpu_custom_call.1} parent=47 // pred_region
          %s325 = sand.u32 %s138, 1
          %s326 = scalar_lea.sflag [#allocation3], %s325
          %s327 = sand.u32 %s138, 1
          %s328 = smul.addr %s327, 8
          %s329 = scalar_lea.vmem [#allocation2], %s328
          %331 = dma.done %s326, 128
        $region52: #{tpu_custom_call.1} parent=47 // pred_fallthru
          _
      $region48: #{tpu_custom_call.1} parent=5 // pred_fallthru
        _
    $region6: #{tpu_custom_call.1} parent=1 // loop_footer
      %s18 = sadd.s32 1, %s14
    $region7: #{tpu_custom_call.1} parent=1 // loop_footer_branch
      %13 = sbr.rel target = $region3
    $region8: #{tpu_custom_call.1} parent=1 // loop_exit
      _
    %332 = vsyncpa [#allocation3], 1
    %s333 = scalar_lea.sflag [#allocation3], 1
    %334 = vsyncpa %s333, 1

// kernel: tpu_custom_call.1
$region0: #{tpu_custom_call.1}
  #allocation0 [shape = 'u32[]', space=smem, size = 0x4, offset = 0x4, fixed_abs, tag = 'smem constant byte address 0x4 - core index']
  #allocation1 [shape = 'u32[72,128]{1,0:T(1,128)}', space=vmem, size = 0x9000, scoped, tag = 'internal scratch']
  %s0 = inlined_call_operand.vmem [shape: f32[16,32], index: 0, kind: input, shape index: {}]
  %s1 = inlined_call_operand.vmem [shape: bf16[32,8], index: 1, kind: input, shape index: {}]
  %s2 = inlined_call_operand.vmem [shape: f32[1,8], index: 2, kind: input, shape index: {}]
  %s3 = inlined_call_operand.vmem [shape: bf16[8,32], index: 3, kind: input, shape index: {}]
  %s4 = inlined_call_operand.vmem [shape: f32[1,32], index: 4, kind: input, shape index: {}]
  %s5 = inlined_call_operand.hbm [shape: f32[16,32], index: 5, kind: output, shape index: {}]
  %s6 = sld [smem:[#allocation0]]
  $region53: #{tpu_custom_call.1} parent=0
    _
  %s8 = ssub.s32 1, %s6
  %s9 = scalar_select 0, %s8, %s6
  $region1: #{tpu_custom_call.1} parent=0
    #allocation2 [shape = 'u8[8192]{0}', space=vmem, size = 0x2000, scoped, tag = 'output window, operand 0']
    #allocation3 [shape = 's32[2]{0}', space=sflag, size = 0x8, scoped, tag = 'scoped memory for tpu_custom_call.1']
    %10 = vsyncpa [#allocation3], 0
    %s11 = scalar_lea.sflag [#allocation3], 1
    %12 = vsyncpa %s11, 0
    loop: start=0, step=1, limit=4
    $region2: #{tpu_custom_call.1} parent=1 // loop_pre_header
      _
    $region3: #{tpu_custom_call.1} parent=1 // loop_header
      %s14 = sphi 0, %s18
      %p15 = scmp.ge.s32.totalorder %s14, 4
      %s24 = sphi 0, %s26
      %s27 = sphi 0, %s24
      %s28 = sphi 0, %s27
      %s44 = sphi 0, %s28
      %s48 = sphi 0, %s48
      %s50 = sphi 0, %s48
      %s51 = sphi 0, %s50
      %s65 = sphi 0, %s51
      %s69 = sphi 0, %s69
      %s71 = sphi 0, %s69
      %s72 = sphi 0, %s71
      %s86 = sphi 0, %s72
      %s90 = sphi 0, %s90
      %s92 = sphi 0, %s90
      %s93 = sphi 0, %s92
      %s107 = sphi 0, %s93
      %s111 = sphi 0, %s111
      %s113 = sphi 0, %s111
      %s114 = sphi 0, %s113
      %s128 = sphi 0, %s114
      %s134 = sphi 0, %s136
      %s137 = sphi 0, %s134
      %s138 = sphi 0, %s137
      %s154 = sphi 0, %s138
    $region4: #{tpu_custom_call.1} parent=1 // loop_header_branch
      %17 = sbr.rel (%p15) target = $region8
    $region5: #{tpu_custom_call.1} parent=1 // loop_body
      %s19 = ssub.s32 %s14, 1
      %s20 = ssub.s32 %s14, 2
      %s21 = sadd.s32 %s14, 1
      %s22 = ssub.s32 %s14, %s21
      %p23 = scmp.eq.s32.totalorder %s22, 0
      %s25 = sadd.s32 %s24, 1
      %s26 = scalar_select %p23, %s24, %s25
      %p29 = pneg %p23
      %p30 = scmp.eq.s32.totalorder %s14, 1
      %p31 = por %p29, %p30
      %p32 = scmp.ne.s32.totalorder %s24, %s27
      %p33 = scmp.eq.s32.totalorder %s14, 0
      %p34 = por %p32, %p33
      %p35 = scmp.ne.s32.totalorder %s24, %s27
      %p36 = scmp.eq.s32.totalorder %s19, 1
      %p37 = por %p35, %p36
      %p38 = scmp.ne.s32.totalorder %s27, %s28
      %p39 = scmp.eq.s32.totalorder %s19, 0
      %p40 = por %p38, %p39
      %p41 = scmp.ne.s32.totalorder %s27, %s28
      %p42 = scmp.eq.s32.totalorder %s20, 1
      %p43 = por %p41, %p42
      %p45 = scmp.ne.s32.totalorder %s28, %s44
      %p46 = scmp.eq.s32.totalorder %s20, 0
      %p47 = por %p45, %p46
      %s49 = sadd.s32 %s48, 1
      %p52 = scmp.eq.s32.totalorder %s14, 1
      %p53 = scmp.ne.s32.totalorder %s48, %s50
      %p54 = scmp.eq.s32.totalorder %s14, 0
      %p55 = por %p53, %p54
      %p56 = scmp.ne.s32.totalorder %s48, %s50
      %p57 = scmp.eq.s32.totalorder %s19, 1
      %p58 = por %p56, %p57
      %p59 = scmp.ne.s32.totalorder %s50, %s51
      %p60 = scmp.eq.s32.totalorder %s19, 0
      %p61 = por %p59, %p60
      %p62 = scmp.ne.s32.totalorder %s50, %s51
      %p63 = scmp.eq.s32.totalorder %s20, 1
      %p64 = por %p62, %p63
      %p66 = scmp.ne.s32.totalorder %s51, %s65
      %p67 = scmp.eq.s32.totalorder %s20, 0
      %p68 = por %p66, %p67
      %s70 = sadd.s32 %s69, 1
      %p73 = scmp.eq.s32.totalorder %s14, 1
      %p74 = scmp.ne.s32.totalorder %s69, %s71
      %p75 = scmp.eq.s32.totalorder %s14, 0
      %p76 = por %p74, %p75
      %p77 = scmp.ne.s32.totalorder %s69, %s71
      %p78 = scmp.eq.s32.totalorder %s19, 1
      %p79 = por %p77, %p78
      %p80 = scmp.ne.s32.totalorder %s71, %s72
      %p81 = scmp.eq.s32.totalorder %s19, 0
      %p82 = por %p80, %p81
      %p83 = scmp.ne.s32.totalorder %s71, %s72
      %p84 = scmp.eq.s32.totalorder %s20, 1
      %p85 = por %p83, %p84
      %p87 = scmp.ne.s32.totalorder %s72, %s86
      %p88 = scmp.eq.s32.totalorder %s20, 0
      %p89 = por %p87, %p88
      %s91 = sadd.s32 %s90, 1
      %p94 = scmp.eq.s32.totalorder %s14, 1
      %p95 = scmp.ne.s32.totalorder %s90, %s92
      %p96 = scmp.eq.s32.totalorder %s14, 0
      %p97 = por %p95, %p96
      %p98 = scmp.ne.s32.totalorder %s90, %s92
      %p99 = scmp.eq.s32.totalorder %s19, 1
      %p100 = por %p98, %p99
      %p101 = scmp.ne.s32.totalorder %s92, %s93
      %p102 = scmp.eq.s32.totalorder %s19, 0
      %p103 = por %p101, %p102
      %p104 = scmp.ne.s32.totalorder %s92, %s93
      %p105 = scmp.eq.s32.totalorder %s20, 1
      %p106 = por %p104, %p105
      %p108 = scmp.ne.s32.totalorder %s93, %s107
      %p109 = scmp.eq.s32.totalorder %s20, 0
      %p110 = por %p108, %p109
      %s112 = sadd.s32 %s111, 1
      %p115 = scmp.eq.s32.totalorder %s14, 1
      %p116 = scmp.ne.s32.totalorder %s111, %s113
      %p117 = scmp.eq.s32.totalorder %s14, 0
      %p118 = por %p116, %p117
      %p119 = scmp.ne.s32.totalorder %s111, %s113
      %p120 = scmp.eq.s32.totalorder %s19, 1
      %p121 = por %p119, %p120
      %p122 = scmp.ne.s32.totalorder %s113, %s114
      %p123 = scmp.eq.s32.totalorder %s19, 0
      %p124 = por %p122, %p123
      %p125 = scmp.ne.s32.totalorder %s113, %s114
      %p126 = scmp.eq.s32.totalorder %s20, 1
      %p127 = por %p125, %p126
      %p129 = scmp.ne.s32.totalorder %s114, %s128
      %p130 = scmp.eq.s32.totalorder %s20, 0
      %p131 = por %p129, %p130
      %s132 = ssub.s32 %s14, %s21
      %p133 = scmp.eq.s32.totalorder %s132, 0
      %s135 = sadd.s32 %s134, 1
      %s136 = scalar_select %p133, %s134, %s135
      %p139 = pneg %p133
      %p140 = scmp.eq.s32.totalorder %s14, 1
      %p141 = por %p139, %p140
      %p142 = scmp.ne.s32.totalorder %s134, %s137
      %p143 = scmp.eq.s32.totalorder %s14, 0
      %p144 = por %p142, %p143
      %p145 = scmp.ne.s32.totalorder %s134, %s137
      %p146 = scmp.eq.s32.totalorder %s19, 1
      %p147 = por %p145, %p146
      %p148 = scmp.ne.s32.totalorder %s137, %s138
      %p149 = scmp.eq.s32.totalorder %s19, 0
      %p150 = por %p148, %p149
      %p151 = scmp.ne.s32.totalorder %s137, %s138
      %p152 = scmp.eq.s32.totalorder %s20, 1
      %p153 = por %p151, %p152
      %p155 = scmp.ne.s32.totalorder %s138, %s154
      %p156 = scmp.eq.s32.totalorder %s20, 0
      %p157 = por %p155, %p156
      %p158 = scmp.le.s32.totalorder 1, %s14
      %p159 = scmp.lt.s32.totalorder %s14, 3
      %p160 = pnand %p158, %p159
      %p161 = pneg %p160
      // Predicated region
      $region9: #{tpu_custom_call.1} parent=5 // pred_check
        _
      $region10: #{tpu_custom_call.1} parent=5 // pred_check_branch
        %163 = sbr.rel (%p160) target = $region12
      $region11: #{tpu_custom_call.1} parent=5 // pred_region
        %s164 = ssub.s32 %s14, 1
        // Predicated region
        $region13: #{tpu_custom_call.1} parent=11 // pred_check
          %p165 = pneg %p61
        $region14: #{tpu_custom_call.1} parent=11 // pred_check_branch
          %167 = sbr.rel (%p165) target = $region16
        $region15: #{tpu_custom_call.1} parent=11 // pred_region
          _
        $region16: #{tpu_custom_call.1} parent=11 // pred_fallthru
          _
        // Predicated region
        $region17: #{tpu_custom_call.1} parent=11 // pred_check
          %p168 = pneg %p82
        $region18: #{tpu_custom_call.1} parent=11 // pred_check_branch
          %170 = sbr.rel (%p168) target = $region20
        $region19: #{tpu_custom_call.1} parent=11 // pred_region
          _
        $region20: #{tpu_custom_call.1} parent=11 // pred_fallthru
          _
        // Predicated region
        $region21: #{tpu_custom_call.1} parent=11 // pred_check
          %p171 = pneg %p103
        $region22: #{tpu_custom_call.1} parent=11 // pred_check_branch
          %173 = sbr.rel (%p171) target = $region24
        $region23: #{tpu_custom_call.1} parent=11 // pred_region
          _
        $region24: #{tpu_custom_call.1} parent=11 // pred_fallthru
          _
        // Predicated region
        $region25: #{tpu_custom_call.1} parent=11 // pred_check
          %p174 = pneg %p124
        $region26: #{tpu_custom_call.1} parent=11 // pred_check_branch
          %176 = sbr.rel (%p174) target = $region28
        $region27: #{tpu_custom_call.1} parent=11 // pred_region
          _
        $region28: #{tpu_custom_call.1} parent=11 // pred_fallthru
          _
      $region12: #{tpu_custom_call.1} parent=5 // pred_fallthru
        _
      %p177 = scmp.lt.s32.totalorder %s14, 2
      // Predicated region
      $region29: #{tpu_custom_call.1} parent=5 // pred_check
        %p178 = pneg %p177
      $region30: #{tpu_custom_call.1} parent=5 // pred_check_branch
        %180 = sbr.rel (%p178) target = $region32
      $region31: #{tpu_custom_call.1} parent=5 // pred_region
        // Predicated region
        $region33: #{tpu_custom_call.1} parent=31 // pred_check
          %p181 = pneg %p34
        $region34: #{tpu_custom_call.1} parent=31 // pred_check_branch
          %183 = sbr.rel (%p181) target = $region36
        $region35: #{tpu_custom_call.1} parent=31 // pred_region
          %p184 = scmp.lt.s32.totalorder %s14, 1
          %s185 = scalar_select %p184, %s14, 1
          %s186 = smul.addr %s185, 8
          %s187 = scalar_lea.vmem %s0, %s186
        $region36: #{tpu_custom_call.1} parent=31 // pred_fallthru
          _
      $region32: #{tpu_custom_call.1} parent=5 // pred_fallthru
        _
      %p188 = scmp.le.s32.totalorder 1, %s14
      %p189 = scmp.lt.s32.totalorder %s14, 3
      %p190 = pnand %p188, %p189
      %p191 = pneg %p190
      // Predicated region
      $region37: #{tpu_custom_call.1} parent=5 // pred_check
        _
      $region38: #{tpu_custom_call.1} parent=5 // pred_check_branch
        %193 = sbr.rel (%p190) target = $region40
      $region39: #{tpu_custom_call.1} parent=5 // pred_region
        %s194 = ssub.s32 %s14, 1
        %p195 = scmp.lt.s32.totalorder %s19, 1
        %s196 = scalar_select %p195, %s19, 1
        %s197 = smul.addr %s196, 8
        %s198 = scalar_lea.vmem %s0, %s197
        %p199 = pneg %p40
        %p200 = pneg %p37
        %p201 = pneg %p61
        %p202 = pneg %p58
        %p203 = pneg %p82
        %p204 = pneg %p79
        %p205 = pneg %p103
        %p206 = pneg %p100
        %p207 = pneg %p124
        %p208 = pneg %p121
        %p209 = pneg %p150
        %p210 = pneg %p147
        %s211 = sand.u32 %s137, 1
        %s212 = scalar_lea.sflag [#allocation3], %s211
        %s213 = sand.u32 %s137, 1
        %s214 = smul.addr %s213, 8
        %s215 = scalar_lea.vmem [#allocation2], %s214
        %p216 = scmp.lt.s32.totalorder %s19, 1
        %s217 = scalar_select %p216, %s19, 1
        %s218 = smul.addr %s217, 8
        %s219 = scalar_lea.vmem %s0, %s218
        %v221 = vld [vmem:[%s219] sm:$0xff]
        %v222 = vpack.c.bf16 %v221, %v221
        %v223 = vld [vmem:[%s1] sm:$0xf]
        %v224 = vld [vmem:[%s1 + $0x4] sm:$0xf]
        %v225 = vld [vmem:[%s1 + $0x8] sm:$0xf]
        %v226 = vld [vmem:[%s1 + $0xc] sm:$0xf]
        %v227 = vld [vmem:[%s2] sm:$0x1]
        %v229 = vperm.slane %v227, 0
        %v235 = vunpack.c.l.b16 %v223
        %v236 = vunpack.c.l.b16 %v224
        %v237 = vunpack.c.l.b16 %v225
        %v238 = vunpack.c.l.b16 %v226
        %v239 = vpack.c.b16 %v236, %v235
        %v240 = vpack.c.b16 %v238, %v237
        %vm243 = vcmask 261120
        %v245 = vsel %vm243, %v222, 0
        %247 = vmatpush.bf16.msra.mxu0 0
        %248 = vmatpush.bf16.msra.mxu0 0
        %249 = vmatpush.bf16.msra.mxu0 0
        %250 = vmatpush.bf16.msra.mxu0 0
        %251 = vmatpush.bf16.msra.mxu0 0
        %252 = vmatpush.bf16.msra.mxu0 0
        %253 = vmatpush.bf16.msra.mxu0 %v240
        %254 = vmatpush.bf16.msra.mxu0 %v239
        %255 = vmatmul.bf16.gmra.mxu0 %v245
        %v256 = vpop.f32.mrf.mxu0
        %v257 = vadd.f32 %v229, %v256
        %v258 = vpop.f32.mrf.mxu0
        %259 = vdwg.mxu0
        %v260 = vmul.f32 %v257, %v257
        %v261 = vmul.f32 %v257, %v260
        %v262 = vmul.f32 %v261, 0.044715
        %v263 = vadd.f32 %v257, %v262
        %v264 = vmul.f32 %v263, 0.7978846
        %v265 = vtanh.pop %v264
        %v266 = vadd.f32 %v265, 1.0
        %v267 = vmul.f32 %v266, 0.5
        %v268 = vmul.f32 %v257, %v267
        %v269 = vpack.c.bf16 %v268, %v268
        %v270 = vld [vmem:[%s3] sm:$0xf]
        %v271 = vld [vmem:[%s4] sm:$0x1]
        %v273 = vperm.slane %v271, 0
        %vm275 = vcmask 64512
        %v277 = vsel %vm275, %v269, 0
        %vm279 = vcmask 1043456
        %v281 = vsel %vm279, %v270, 0
        %283 = vmatpush.bf16.msra.mxu0 0
        %284 = vmatpush.bf16.msra.mxu0 0
        %285 = vmatpush.bf16.msra.mxu0 0
        %286 = vmatpush.bf16.msra.mxu0 0
        %287 = vmatpush.bf16.msra.mxu0 0
        %288 = vmatpush.bf16.msra.mxu0 0
        %289 = vmatpush.bf16.msra.mxu0 0
        %290 = vmatpush.bf16.msra.mxu0 %v281
        %291 = vmatmul.bf16.gmra.mxu0 %v277
        %v292 = vpop.f32.mrf.mxu0
        %v293 = vadd.f32 %v273, %v292
        %v294 = vpop.f32.mrf.mxu0
        %295 = vdwg.mxu0
        %v296 = vadd.f32 %v293, %v221
        %297 = vst.msk [vmem:[%s215] sm:$0xff] %vm243, %v296
        %s298 = sand.u32 %s137, 1
        %s299 = scalar_lea.sflag [#allocation3], %s298
        %s300 = sand.u32 %s137, 1
        %s301 = smul.addr %s300, 8
        %s302 = scalar_lea.vmem [#allocation2], %s301
        // Predicated region
        $region41: #{tpu_custom_call.1} parent=39 // pred_check
          %p303 = pneg %p147
        $region42: #{tpu_custom_call.1} parent=39 // pred_check_branch
          %305 = sbr.rel (%p303) target = $region44
        $region43: #{tpu_custom_call.1} parent=39 // pred_region
          %307 = vsyncadd %s299, 0
          %s308 = smul.addr %s19, 8
          %s309 = scalar_lea.hbm %s5, %s308
          %s311 = sshll.u32 %s302, 4
          %s312 = int_to_ptr.vmem [resolvable:$true] %s311
          %s313 = sshll.u32 %s309, 4
          %s314 = int_to_ptr.hbm [resolvable:$true] %s313
          %316 = dma.vmem_to_hbm [thread:$0]  %s312, 128, %s314, %s299
        $region44: #{tpu_custom_call.1} parent=39 // pred_fallthru
          _
      $region40: #{tpu_custom_call.1} parent=5 // pred_fallthru
        _
      %p317 = scmp.le.s32.totalorder 2, %s14
      // Predicated region
      $region45: #{tpu_custom_call.1} parent=5 // pred_check
        %p318 = pneg %p317
      $region46: #{tpu_custom_call.1} parent=5 // pred_check_branch
        %320 = sbr.rel (%p318) target = $region48
      $region47: #{tpu_custom_call.1} parent=5 // pred_region
        %s321 = ssub.s32 %s14, 2
        // Predicated region
        $region49: #{tpu_custom_call.1} parent=47 // pred_check
          %p322 = pneg %p153
        $region50: #{tpu_custom_call.1} parent=47 // pred_check_branch
          %324 = sbr.rel (%p322) target = $region52
        $region51: #{tpu_custom_call.1} parent=47 // pred_region
          %s325 = sand.u32 %s138, 1
          %s326 = scalar_lea.sflag [#allocation3], %s325
          %s327 = sand.u32 %s138, 1
          %s328 = smul.addr %s327, 8
          %s329 = scalar_lea.vmem [#allocation2], %s328
          %331 = dma.done %s326, 128
        $region52: #{tpu_custom_call.1} parent=47 // pred_fallthru
          _
      $region48: #{tpu_custom_call.1} parent=5 // pred_fallthru
        _
    $region6: #{tpu_custom_call.1} parent=1 // loop_footer
      %s18 = sadd.s32 1, %s14
    $region7: #{tpu_custom_call.1} parent=1 // loop_footer_branch
      %13 = sbr.rel target = $region3
    $region8: #{tpu_custom_call.1} parent=1 // loop_exit
      _
    %332 = vsyncpa [#allocation3], 1
    %s333 = scalar_lea.sflag [#allocation3], 1
    %334 = vsyncpa %s333, 1

</llo_original>
